<compile_context>
chip_gen: v7x
topology: tpu7x:2x2x1
jax: 0.10.0
libtpu: 0.0.40
codegen_flags: <defaults>
</compile_context>

<pallas_src>
import functools

import jax
import jax.numpy as jnp
from jax.experimental import pallas as pl
from jax.experimental.pallas import tpu as pltpu

HIDDEN = 64
TRUNK_W = 2 * HIDDEN     # lane width of the row-paired trunk (=128, lane-dense)
BIAS_LANES = 128


def _round_up(x, m):
    return ((x + m - 1) // m) * m


def _choose_tile_rows2(rows2, target2):
    """Largest multiple of 8 that exactly divides rows2 and is <= target2.

    rows2 is always a multiple of 8 (batch padded to a multiple of 16, then
    halved by row pairing).  Exact division -> no padded-tile waste at awkward
    batch sizes.  When rows2 >= 16 we cap at rows2 // 2 so the grid has at
    least 2 blocks (lets the 'parallel' axis shard across both v7x TensorCores).
    """
    cap = min(target2, rows2)
    if rows2 >= 16:
        cap = min(cap, rows2 // 2)
    cap = max(cap, 8)
    best = 8
    for t in range(8, cap + 1, 8):
        if rows2 % t == 0:
            best = t
    return best


def actor_critic_kernel(x_ref, w1_ref, w2_ref, wh_ref, b_ref, out_ref):
    # Lane-0-aligned packed biases: [3, 128] = [b1|b1], [b2|b2], [bh|bh|0...]
    b1 = b_ref[0:1, 0:TRUNK_W]
    b2 = b_ref[1:2, 0:TRUNK_W]
    bh = b_ref[2:3, 0:out_ref.shape[-1]]

    # Shared trunk (two batch rows per kernel row -> 128-lane dense vregs):
    # fc1 -> tanh -> fc2 -> tanh
    h1 = jnp.tanh(
        jnp.dot(x_ref[...], w1_ref[...], preferred_element_type=jnp.float32) + b1
    )
    h2 = jnp.tanh(
        jnp.dot(h1, w2_ref[...], preferred_element_type=jnp.float32) + b2
    )

    # Fused actor+critic head, narrow writeback (2*OUT_W lanes per packed row).
    out_ref[...] = (
        jnp.dot(h2, wh_ref[...], preferred_element_type=jnp.float32) + bh
    )


@functools.partial(jax.jit, static_argnames=("action_space", "tile_b"))
def actor_critic_forward(x, packed, sigma, *, action_space, tile_b=4096):
    """Fused forward pass.

    x:      [B, state_space] float32
    packed: dict of pre-packed kernel operands (see pack_params)
    sigma:  [1, action_space] float32
    returns (mu [B, A], var [B, A], value [B, 1])
    """
    B, S = x.shape
    A = action_space
    out_w = packed["w_heads"].shape[-1] // 2      # per-original-row head width

    x = x.astype(jnp.float32)

    # Pad batch only (never features), and only when needed, to a multiple of 16
    # so that two-row packing keeps the packed-row count a multiple of 8.
    b_pad = _round_up(max(B, 1), 16)
    if b_pad != B:
        x = jnp.zeros((b_pad, S), jnp.float32).at[:B].set(x)

    # Pack two batch rows per kernel row: free row-major reshape.
    rows2 = b_pad // 2
    x2 = x.reshape(rows2, 2 * S)

    tile2 = _choose_tile_rows2(rows2, max(8, tile_b // 2))
    n_blocks = rows2 // tile2

    flops = 2 * rows2 * (2 * S * TRUNK_W + TRUNK_W * TRUNK_W + TRUNK_W * 2 * out_w)
    transcendentals = 2 * rows2 * TRUNK_W  # two tanh layers
    bytes_accessed = 4 * (
        rows2 * 2 * S + 2 * S * TRUNK_W + TRUNK_W * TRUNK_W
        + TRUNK_W * 2 * out_w + 3 * BIAS_LANES + rows2 * 2 * out_w
    )

    out2 = pl.pallas_call(
        actor_critic_kernel,
        out_shape=jax.ShapeDtypeStruct((rows2, 2 * out_w), jnp.float32),
        grid_spec=pltpu.PrefetchScalarGridSpec(
            num_scalar_prefetch=0,
            grid=(n_blocks,),
            in_specs=[
                pl.BlockSpec((tile2, 2 * S), lambda i: (i, 0)),          # x tile
                pl.BlockSpec((2 * S, TRUNK_W), lambda i: (0, 0)),        # w1 blkdiag
                pl.BlockSpec((TRUNK_W, TRUNK_W), lambda i: (0, 0)),      # w2 blkdiag
                pl.BlockSpec((TRUNK_W, 2 * out_w), lambda i: (0, 0)),    # heads blkdiag
                pl.BlockSpec((3, BIAS_LANES), lambda i: (0, 0)),         # packed biases
            ],
            out_specs=pl.BlockSpec((tile2, 2 * out_w), lambda i: (i, 0)),
        ),
        compiler_params=pltpu.CompilerParams(
            dimension_semantics=("parallel",),
        ),
        cost_estimate=pl.CostEstimate(
            flops=flops,
            transcendentals=transcendentals,
            bytes_accessed=bytes_accessed,
        ),
    )(x2, packed["w1"], packed["w2"], packed["w_heads"], packed["biases"])

    # Unpack the row pairing (free row-major reshape), then the narrow head lanes.
    out = out2.reshape(b_pad, out_w)
    mu = out[:B, :A]
    value = out[:B, A:A + 1]
    # var = exp(sigma).expand_as(mu): input-independent, computed outside the kernel.
    var = jnp.broadcast_to(jnp.exp(sigma), (B, A))
    return mu, var, value


def init_params(key, state_space, action_space):
    """Parameter init mirroring layer_init (orthogonal * sqrt(2), zero bias).

    Weights stored as [in, out] (transpose of PyTorch's nn.Linear [out, in]).
    """
    ortho = jax.nn.initializers.orthogonal(scale=jnp.sqrt(2.0))
    k1, k2, k3, k4, k5 = jax.random.split(key, 5)
    return {
        "w1": ortho(k1, (state_space, HIDDEN), jnp.float32),
        "b1": jnp.zeros((1, HIDDEN), jnp.float32),
        "w2": ortho(k2, (HIDDEN, HIDDEN), jnp.float32),
        "b2": jnp.zeros((1, HIDDEN), jnp.float32),
        "wa": ortho(k3, (HIDDEN, action_space), jnp.float32),
        "ba": jnp.zeros((1, action_space), jnp.float32),
        "wv": ortho(k4, (HIDDEN, 1), jnp.float32),
        "bv": jnp.zeros((1, 1), jnp.float32),
        "sigma": jnp.zeros((1, action_space), jnp.float32),
        # Unused-by-forward layer (self.mu = Linear(16, A)) kept for shape fidelity:
        "w_mu_unused": ortho(k5, (16, action_space), jnp.float32),
        "b_mu_unused": jnp.zeros((1, action_space), jnp.float32),
    }


def pack_params(p, state_space, action_space):
    """Host-side packing of parameters for the fused row-paired kernel (done once).

    Block-diagonal duplication maps [x_a | x_b] row pairs through the same MLP:
      w1_blk = blkdiag(w1, w1)   : (2S, 128)
      w2_blk = blkdiag(w2, w2)   : (128, 128)
      wh_blk = blkdiag(wh, wh)   : (128, 2*OUT_W), wh = [wa | wv | 0-pad] (64, OUT_W)
    Biases are packed lane-0-aligned as a (3, 128) block.
    """
    S, A, H = state_space, action_space, HIDDEN
    out_w = max(8, _round_up(A + 1, 8))   # mu(A) | value(1) | zero pad -> sublane-friendly

    # Fused actor+critic head for a single row.
    wh = (
        jnp.zeros((H, out_w), jnp.float32)
        .at[:, :A].set(p["wa"])
        .at[:, A:A + 1].set(p["wv"])
    )
    bh = (
        jnp.zeros((1, out_w), jnp.float32)
        .at[:, :A].set(p["ba"])
        .at[:, A:A + 1].set(p["bv"])
    )

    # Block-diagonal duplication for two-rows-per-lane-row packing.
    w1_blk = (
        jnp.zeros((2 * S, 2 * H), jnp.float32)
        .at[:S, :H].set(p["w1"])
        .at[S:, H:].set(p["w1"])
    )
    w2_blk = (
        jnp.zeros((2 * H, 2 * H), jnp.float32)
        .at[:H, :H].set(p["w2"])
        .at[H:, H:].set(p["w2"])
    )
    wh_blk = (
        jnp.zeros((2 * H, 2 * out_w), jnp.float32)
        .at[:H, :out_w].set(wh)
        .at[H:, out_w:].set(wh)
    )

    # Lane-0-aligned packed biases: (3, 128).
    biases = (
        jnp.zeros((3, BIAS_LANES), jnp.float32)
        .at[0, :H].set(p["b1"][0])
        .at[0, H:2 * H].set(p["b1"][0])
        .at[1, :H].set(p["b2"][0])
        .at[1, H:2 * H].set(p["b2"][0])
        .at[2, :out_w].set(bh[0])
        .at[2, out_w:2 * out_w].set(bh[0])
    )
    return {"w1": w1_blk, "w2": w2_blk, "w_heads": wh_blk, "biases": biases}


def reference_forward(x, p):
    h1 = jnp.tanh(x @ p["w1"] + p["b1"])
    h2 = jnp.tanh(h1 @ p["w2"] + p["b2"])
    mu = h2 @ p["wa"] + p["ba"]
    var = jnp.exp(jnp.broadcast_to(p["sigma"], mu.shape))
    value = h2 @ p["wv"] + p["bv"]
    return mu, var, value


if __name__ == "__main__":
    # HalfCheetah-v4: state_space=17, action_space=6. Small batch for the demo
    # (the wrapper tiles/amortizes automatically at larger batch sizes).
    state_space, action_space, batch = 17, 6, 8

    key = jax.random.PRNGKey(0)
    key_p, key_x = jax.random.split(key)
    params = init_params(key_p, state_space, action_space)
    packed = pack_params(params, state_space, action_space)
    x = jax.random.normal(key_x, (batch, state_space), dtype=jnp.float32)

    mu, var, value = actor_critic_forward(
        x, packed, params["sigma"], action_space=action_space
    )
    jax.block_until_ready((mu, var, value))

    # Sanity check against a plain-JAX reference using the unpacked params.
    mu_r, var_r, val_r = reference_forward(x, params)
    assert mu.shape == (batch, action_space)
    assert var.shape == (batch, action_space)
    assert value.shape == (batch, 1)
    assert jnp.allclose(mu, mu_r, atol=1e-5, rtol=1e-5)
    assert jnp.allclose(var, var_r, atol=1e-5, rtol=1e-5)
    assert jnp.allclose(value, val_r, atol=1e-5, rtol=1e-5)

    print("KERNEL_OK")
</pallas_src>

<mosaic_0001>
module attributes {stable_mosaic.version = 11 : i64} {
  func.func @actor_critic_kernel(%arg0: i32, %arg1: memref<8x34xf32, #tpu.memory_space<vmem>>, %arg2: memref<34x128xf32, #tpu.memory_space<vmem>>, %arg3: memref<128x128xf32, #tpu.memory_space<vmem>>, %arg4: memref<128x16xf32, #tpu.memory_space<vmem>>, %arg5: memref<3x128xf32, #tpu.memory_space<vmem>>, %arg6: memref<8x16xf32, #tpu.memory_space<vmem>>) attributes {dimension_semantics = [#tpu.dimension_semantics<parallel>], iteration_bounds = array<i64: 1>, scalar_prefetch = 0 : i64, scratch_operands = 0 : i64, tpu.core_type = #tpu.core_type<tc>, window_params = [{transform_indices = @transform_0, window_bounds = array<i64: 8, 34>}, {pipeline_mode = #tpu.pipeline_mode<synchronous>, transform_indices = @transform_1, window_bounds = array<i64: 34, 128>}, {pipeline_mode = #tpu.pipeline_mode<synchronous>, transform_indices = @transform_2, window_bounds = array<i64: 128, 128>}, {pipeline_mode = #tpu.pipeline_mode<synchronous>, transform_indices = @transform_3, window_bounds = array<i64: 128, 16>}, {pipeline_mode = #tpu.pipeline_mode<synchronous>, transform_indices = @transform_4, window_bounds = array<i64: 3, 128>}, {transform_indices = @transform_5, window_bounds = array<i64: 8, 16>}]} {
    %c0 = arith.constant 0 : index
    %c0_0 = arith.constant 0 : index
    %0 = vector.load %arg5[%c0, %c0_0] : memref<3x128xf32, #tpu.memory_space<vmem>>, vector<1x128xf32>
    %c1 = arith.constant 1 : index
    %c0_1 = arith.constant 0 : index
    %1 = vector.load %arg5[%c1, %c0_1] : memref<3x128xf32, #tpu.memory_space<vmem>>, vector<1x128xf32>
    %c2 = arith.constant 2 : index
    %c0_2 = arith.constant 0 : index
    %2 = vector.load %arg5[%c2, %c0_2] : memref<3x128xf32, #tpu.memory_space<vmem>>, vector<1x16xf32>
    %c0_3 = arith.constant 0 : index
    %c0_4 = arith.constant 0 : index
    %3 = vector.load %arg1[%c0_3, %c0_4] : memref<8x34xf32, #tpu.memory_space<vmem>>, vector<8x34xf32>
    %c0_5 = arith.constant 0 : index
    %c0_6 = arith.constant 0 : index
    %4 = vector.load %arg2[%c0_5, %c0_6] : memref<34x128xf32, #tpu.memory_space<vmem>>, vector<34x128xf32>
    %cst = arith.constant dense<0.000000e+00> : vector<8x128xf32>
    %5 = tpu.matmul %3, %4, %cst {dimension_numbers = #tpu.dot_dimension_numbers<[1], [0], [0], [1], [0, 0, 1, 1], [], []>} : vector<8x34xf32>, vector<34x128xf32>, vector<8x128xf32> -> vector<8x128xf32>
    %6 = vector.broadcast %0 : vector<1x128xf32> to vector<8x128xf32>
    %7 = arith.addf %5, %6 : vector<8x128xf32>
    %8 = math.tanh %7 : vector<8x128xf32>
    %c0_7 = arith.constant 0 : index
    %c0_8 = arith.constant 0 : index
    %9 = vector.load %arg3[%c0_7, %c0_8] : memref<128x128xf32, #tpu.memory_space<vmem>>, vector<128x128xf32>
    %cst_9 = arith.constant dense<0.000000e+00> : vector<8x128xf32>
    %10 = tpu.matmul %8, %9, %cst_9 {dimension_numbers = #tpu.dot_dimension_numbers<[1], [0], [0], [1], [0, 0, 1, 1], [], []>} : vector<8x128xf32>, vector<128x128xf32>, vector<8x128xf32> -> vector<8x128xf32>
    %11 = vector.broadcast %1 : vector<1x128xf32> to vector<8x128xf32>
    %12 = arith.addf %10, %11 : vector<8x128xf32>
    %13 = math.tanh %12 : vector<8x128xf32>
    %c0_10 = arith.constant 0 : index
    %c0_11 = arith.constant 0 : index
    %14 = vector.load %arg4[%c0_10, %c0_11] : memref<128x16xf32, #tpu.memory_space<vmem>>, vector<128x16xf32>
    %cst_12 = arith.constant dense<0.000000e+00> : vector<8x16xf32>
    %15 = tpu.matmul %13, %14, %cst_12 {dimension_numbers = #tpu.dot_dimension_numbers<[1], [0], [0], [1], [0, 0, 1, 1], [], []>} : vector<8x128xf32>, vector<128x16xf32>, vector<8x16xf32> -> vector<8x16xf32>
    %16 = vector.broadcast %2 : vector<1x16xf32> to vector<8x16xf32>
    %17 = arith.addf %15, %16 : vector<8x16xf32>
    %c0_13 = arith.constant 0 : index
    %c0_14 = arith.constant 0 : index
    %18 = vector.load %arg6[%c0_13, %c0_14] : memref<8x16xf32, #tpu.memory_space<vmem>>, vector<8x16xf32>
    tpu.vector_store %arg6[%c0_13, %c0_14], %17 {strides = array<i32>} : memref<8x16xf32, #tpu.memory_space<vmem>>, vector<8x16xf32>,
    return
  }
  func.func @transform_0(%arg0: i32) -> (i32, i32) {
    %c0_i32 = arith.constant 0 : i32
    %c0_i32_0 = arith.constant 0 : i32
    return %arg0, %c0_i32 : i32, i32
  }
  func.func @transform_1(%arg0: i32) -> (i32, i32) {
    %c0_i32 = arith.constant 0 : i32
    %c0_i32_0 = arith.constant 0 : i32
    %c0_i32_1 = arith.constant 0 : i32
    return %c0_i32, %c0_i32_0 : i32, i32
  }
  func.func @transform_2(%arg0: i32) -> (i32, i32) {
    %c0_i32 = arith.constant 0 : i32
    %c0_i32_0 = arith.constant 0 : i32
    %c0_i32_1 = arith.constant 0 : i32
    return %c0_i32, %c0_i32_0 : i32, i32
  }
  func.func @transform_3(%arg0: i32) -> (i32, i32) {
    %c0_i32 = arith.constant 0 : i32
    %c0_i32_0 = arith.constant 0 : i32
    %c0_i32_1 = arith.constant 0 : i32
    return %c0_i32, %c0_i32_0 : i32, i32
  }
  func.func @transform_4(%arg0: i32) -> (i32, i32) {
    %c0_i32 = arith.constant 0 : i32
    %c0_i32_0 = arith.constant 0 : i32
    %c0_i32_1 = arith.constant 0 : i32
    return %c0_i32, %c0_i32_0 : i32, i32
  }
  func.func @transform_5(%arg0: i32) -> (i32, i32) {
    %c0_i32 = arith.constant 0 : i32
    %c0_i32_0 = arith.constant 0 : i32
    return %arg0, %c0_i32 : i32, i32
  }
}

</mosaic_0001>

<llo_original>
// kernel: actor_critic_forward.1
$region0: #{actor_critic_forward.1}
  #allocation0 [shape = 'u32[]', space=smem, size = 0x4, offset = 0x4, fixed_abs, tag = 'smem constant byte address 0x4 - core index']
  #allocation1 [shape = 'u32[144,128]{1,0:T(1,128)}', space=vmem, size = 0x12000, scoped, tag = 'internal scratch']
  %s0 = inlined_call_operand.vmem [shape: f32[8,34], index: 0, kind: input, shape index: {}]
  %s1 = inlined_call_operand.vmem [shape: f32[34,128], index: 1, kind: input, shape index: {}]
  %s2 = inlined_call_operand.vmem [shape: f32[128,128], index: 2, kind: input, shape index: {}]
  %s3 = inlined_call_operand.vmem [shape: f32[128,16], index: 3, kind: input, shape index: {}]
  %s4 = inlined_call_operand.vmem [shape: f32[3,128], index: 4, kind: input, shape index: {}]
  %s5 = inlined_call_operand.vmem [shape: f32[8,16], index: 5, kind: output, shape index: {}]
  %s6 = sld [smem:[#allocation0]]
  $region30: #{actor_critic_forward.1} parent=0
    _
  %s8 = ssub.s32 1, %s6
  %s9 = scalar_select 0, %s8, %s6
  // Predicated region
  $region2: #{actor_critic_forward.1} parent=0 // pred_check
    _
  $region3: #{actor_critic_forward.1} parent=0 // pred_check_branch
    %11 = sbr.rel (0) target = $region5
  $region4: #{actor_critic_forward.1} parent=0 // pred_region
    _
  $region5: #{actor_critic_forward.1} parent=0 // pred_fallthru
    _
  // Predicated region
  $region6: #{actor_critic_forward.1} parent=0 // pred_check
    _
  $region7: #{actor_critic_forward.1} parent=0 // pred_check_branch
    %13 = sbr.rel (0) target = $region9
  $region8: #{actor_critic_forward.1} parent=0 // pred_region
    _
  $region9: #{actor_critic_forward.1} parent=0 // pred_fallthru
    _
  // Predicated region
  $region10: #{actor_critic_forward.1} parent=0 // pred_check
    _
  $region11: #{actor_critic_forward.1} parent=0 // pred_check_branch
    %15 = sbr.rel (0) target = $region13
  $region12: #{actor_critic_forward.1} parent=0 // pred_region
    _
  $region13: #{actor_critic_forward.1} parent=0 // pred_fallthru
    _
  // Predicated region
  $region14: #{actor_critic_forward.1} parent=0 // pred_check
    _
  $region15: #{actor_critic_forward.1} parent=0 // pred_check_branch
    %17 = sbr.rel (0) target = $region17
  $region16: #{actor_critic_forward.1} parent=0 // pred_region
    _
  $region17: #{actor_critic_forward.1} parent=0 // pred_fallthru
    _
  // Predicated region
  $region18: #{actor_critic_forward.1} parent=0 // pred_check
    _
  $region19: #{actor_critic_forward.1} parent=0 // pred_check_branch
    %19 = sbr.rel (0) target = $region21
  $region20: #{actor_critic_forward.1} parent=0 // pred_region
    _
  $region21: #{actor_critic_forward.1} parent=0 // pred_fallthru
    _
  %v20 = vld [vmem:[%s4] sm:$0x1]
  %v21 = vld [vmem:[%s4 + $0x1] sm:$0x1]
  %v22 = vld [vmem:[%s4 + $0x2] sm:$0x1]
  %v23 = vld [vmem:[%s0] sm:$0xff]
  %v24 = vld [vmem:[%s1] sm:$0xff]
  %v25 = vld [vmem:[%s1 + $0x8] sm:$0xff]
  %v26 = vld [vmem:[%s1 + $0x10] sm:$0xff]
  %v27 = vld [vmem:[%s1 + $0x18] sm:$0xff]
  %v28 = vld [vmem:[%s1 + $0x20] sm:$0x3]
  %v29 = vlaneseq
  %v30 = vshrl.u32 %v29, 7
  %v31 = vsub.s32 0, %v30
  %v32 = vrot.slane %v20, %v31
  %vm33 = vcmask 277504
  %v35 = vsel %vm33, %v23, 0
  %vm37 = vcmask 1041408
  %v39 = vsel %vm37, %v28, 0
  %41 = vmatprep.subr.mxu0 0.0
  %42 = vmatpush1.msra.mxu0 %v24
  %43 = vmatprep.subr.mxu0 0.0
  %44 = vmatpush1.msra.mxu0 %v25
  %45 = vmatprep.subr.mxu0 0.0
  %46 = vmatpush1.msra.mxu0 %v26
  %47 = vmatprep.subr.mxu0 0.0
  %48 = vmatpush1.msra.mxu0 %v27
  %49 = vmatprep.subr.mxu0 0.0
  %50 = vmatpush1.msra.mxu0 %v39
  %51 = vmatprep.subr.mxu0 0.0
  %52 = vmatpush1.msra.mxu0 0.0
  %53 = vmatprep.subr.mxu0 0.0
  %54 = vmatpush1.msra.mxu0 0.0
  %55 = vmatprep.subr.mxu0 0.0
  %56 = vmatpush1.msra.mxu0 0.0
  %57 = vmatprep.subr.mxu0 0.0
  %58 = vmatpush1.msra.mxu0 0.0
  %59 = vmatprep.subr.mxu0 0.0
  %60 = vmatpush1.msra.mxu0 0.0
  %61 = vmatprep.subr.mxu0 0.0
  %62 = vmatpush1.msra.mxu0 0.0
  %63 = vmatprep.subr.mxu0 0.0
  %64 = vmatpush1.msra.mxu0 0.0
  %65 = vmatprep.subr.mxu0 0.0
  %66 = vmatpush1.msra.mxu0 0.0
  %67 = vmatprep.subr.mxu0 0.0
  %68 = vmatpush1.msra.mxu0 0.0
  %69 = vmatprep.subr.mxu0 0.0
  %70 = vmatpush1.msra.mxu0 0.0
  %71 = vmatprep.subr.mxu0 0.0
  %72 = vmatpush1.msra.mxu0 0.0
  %73 = vmatprep.subr.mxu0 0.0
  %74 = vmatpush1.msra.mxu0 0.0
  %75 = vmatprep.subr.mxu0 0.0
  %76 = vmatpush1.msra.mxu0 0.0
  %77 = vmatprep.subr.mxu0 0.0
  %78 = vmatpush1.msra.mxu0 0.0
  %79 = vmatprep.subr.mxu0 0.0
  %80 = vmatpush1.msra.mxu0 0.0
  %81 = vmatprep.subr.mxu0 0.0
  %82 = vmatpush1.msra.mxu0 0.0
  %83 = vmatprep.subr.mxu0 0.0
  %84 = vmatpush1.msra.mxu0 0.0
  %85 = vmatprep.subr.mxu0 0.0
  %86 = vmatpush1.msra.mxu0 0.0
  %87 = vmatprep.subr.mxu0 0.0
  %88 = vmatpush1.msra.mxu0 0.0
  %89 = vmatprep.subr.mxu0 0.0
  %90 = vmatpush1.msra.mxu0 0.0
  %91 = vmatprep.subr.mxu0 0.0
  %92 = vmatpush1.msra.mxu0 0.0
  %93 = vmatprep.subr.mxu0 0.0
  %94 = vmatpush1.msra.mxu0 0.0
  %95 = vmatprep.subr.mxu0 0.0
  %96 = vmatpush1.msra.mxu0 0.0
  %97 = vmatprep.subr.mxu0 0.0
  %98 = vmatpush1.msra.mxu0 0.0
  %99 = vmatprep.subr.mxu0 0.0
  %100 = vmatpush1.msra.mxu0 0.0
  %101 = vmatprep.subr.mxu0 0.0
  %102 = vmatpush1.msra.mxu0 0.0
  %103 = vmatprep.subr.mxu0 0.0
  %104 = vmatpush1.msra.mxu0 0.0
  %105 = vmatprep.mubr.f32.mxu0 0.0
  %106 = vmatmul.mubr.f32.gmra.mrb[0].mxu0 %v35
  %v107 = vpop.f32.mrb[0].mxu0
  %v108 = vadd.f32 %v32, %v107
  %v109 = vpop.f32.mrb[0].mxu0
  %110 = vdwg.mxu0
  %v111 = vtanh.pop %v108
  %v112 = vld [vmem:[%s2] sm:$0xff]
  %v113 = vld [vmem:[%s2 + $0x8] sm:$0xff]
  %v114 = vld [vmem:[%s2 + $0x10] sm:$0xff]
  %v115 = vld [vmem:[%s2 + $0x18] sm:$0xff]
  %v116 = vld [vmem:[%s2 + $0x20] sm:$0xff]
  %v117 = vld [vmem:[%s2 + $0x28] sm:$0xff]
  %v118 = vld [vmem:[%s2 + $0x30] sm:$0xff]
  %v119 = vld [vmem:[%s2 + $0x38] sm:$0xff]
  %v120 = vld [vmem:[%s2 + $0x40] sm:$0xff]
  %v121 = vld [vmem:[%s2 + $0x48] sm:$0xff]
  %v122 = vld [vmem:[%s2 + $0x50] sm:$0xff]
  %v123 = vld [vmem:[%s2 + $0x58] sm:$0xff]
  %v124 = vld [vmem:[%s2 + $0x60] sm:$0xff]
  %v125 = vld [vmem:[%s2 + $0x68] sm:$0xff]
  %v126 = vld [vmem:[%s2 + $0x70] sm:$0xff]
  %v127 = vld [vmem:[%s2 + $0x78] sm:$0xff]
  %v128 = vlaneseq
  %v129 = vshrl.u32 %v128, 7
  %v130 = vsub.s32 0, %v129
  %v131 = vrot.slane %v21, %v130
  %132 = vmatprep.subr.mxu0 0.0
  %133 = vmatpush1.msra.mxu0 %v112
  %134 = vmatprep.subr.mxu0 0.0
  %135 = vmatpush1.msra.mxu0 %v113
  %136 = vmatprep.subr.mxu0 0.0
  %137 = vmatpush1.msra.mxu0 %v114
  %138 = vmatprep.subr.mxu0 0.0
  %139 = vmatpush1.msra.mxu0 %v115
  %140 = vmatprep.subr.mxu0 0.0
  %141 = vmatpush1.msra.mxu0 %v116
  %142 = vmatprep.subr.mxu0 0.0
  %143 = vmatpush1.msra.mxu0 %v117
  %144 = vmatprep.subr.mxu0 0.0
  %145 = vmatpush1.msra.mxu0 %v118
  %146 = vmatprep.subr.mxu0 0.0
  %147 = vmatpush1.msra.mxu0 %v119
  %148 = vmatprep.subr.mxu0 0.0
  %149 = vmatpush1.msra.mxu0 %v120
  %150 = vmatprep.subr.mxu0 0.0
  %151 = vmatpush1.msra.mxu0 %v121
  %152 = vmatprep.subr.mxu0 0.0
  %153 = vmatpush1.msra.mxu0 %v122
  %154 = vmatprep.subr.mxu0 0.0
  %155 = vmatpush1.msra.mxu0 %v123
  %156 = vmatprep.subr.mxu0 0.0
  %157 = vmatpush1.msra.mxu0 %v124
  %158 = vmatprep.subr.mxu0 0.0
  %159 = vmatpush1.msra.mxu0 %v125
  %160 = vmatprep.subr.mxu0 0.0
  %161 = vmatpush1.msra.mxu0 %v126
  %162 = vmatprep.subr.mxu0 0.0
  %163 = vmatpush1.msra.mxu0 %v127
  %164 = vmatprep.subr.mxu0 0.0
  %165 = vmatpush1.msra.mxu0 0.0
  %166 = vmatprep.subr.mxu0 0.0
  %167 = vmatpush1.msra.mxu0 0.0
  %168 = vmatprep.subr.mxu0 0.0
  %169 = vmatpush1.msra.mxu0 0.0
  %170 = vmatprep.subr.mxu0 0.0
  %171 = vmatpush1.msra.mxu0 0.0
  %172 = vmatprep.subr.mxu0 0.0
  %173 = vmatpush1.msra.mxu0 0.0
  %174 = vmatprep.subr.mxu0 0.0
  %175 = vmatpush1.msra.mxu0 0.0
  %176 = vmatprep.subr.mxu0 0.0
  %177 = vmatpush1.msra.mxu0 0.0
  %178 = vmatprep.subr.mxu0 0.0
  %179 = vmatpush1.msra.mxu0 0.0
  %180 = vmatprep.subr.mxu0 0.0
  %181 = vmatpush1.msra.mxu0 0.0
  %182 = vmatprep.subr.mxu0 0.0
  %183 = vmatpush1.msra.mxu0 0.0
  %184 = vmatprep.subr.mxu0 0.0
  %185 = vmatpush1.msra.mxu0 0.0
  %186 = vmatprep.subr.mxu0 0.0
  %187 = vmatpush1.msra.mxu0 0.0
  %188 = vmatprep.subr.mxu0 0.0
  %189 = vmatpush1.msra.mxu0 0.0
  %190 = vmatprep.subr.mxu0 0.0
  %191 = vmatpush1.msra.mxu0 0.0
  %192 = vmatprep.subr.mxu0 0.0
  %193 = vmatpush1.msra.mxu0 0.0
  %194 = vmatprep.subr.mxu0 0.0
  %195 = vmatpush1.msra.mxu0 0.0
  %196 = vmatprep.mubr.f32.mxu0 0.0
  %197 = vmatmul.mubr.f32.gmra.mrb[0].mxu0 %v111
  %v198 = vpop.f32.mrb[0].mxu0
  %v199 = vadd.f32 %v131, %v198
  %v200 = vpop.f32.mrb[0].mxu0
  %201 = vdwg.mxu0
  %v202 = vtanh.pop %v199
  %v203 = vld [vmem:[%s3] sm:$0xff]
  %v204 = vld [vmem:[%s3 + $0x8] sm:$0xff]
  %v205 = vld [vmem:[%s3 + $0x10] sm:$0xff]
  %v206 = vld [vmem:[%s3 + $0x18] sm:$0xff]
  %v207 = vld [vmem:[%s3 + $0x20] sm:$0xff]
  %v208 = vld [vmem:[%s3 + $0x28] sm:$0xff]
  %v209 = vld [vmem:[%s3 + $0x30] sm:$0xff]
  %v210 = vld [vmem:[%s3 + $0x38] sm:$0xff]
  %v211 = vld [vmem:[%s3 + $0x40] sm:$0xff]
  %v212 = vld [vmem:[%s3 + $0x48] sm:$0xff]
  %v213 = vld [vmem:[%s3 + $0x50] sm:$0xff]
  %v214 = vld [vmem:[%s3 + $0x58] sm:$0xff]
  %v215 = vld [vmem:[%s3 + $0x60] sm:$0xff]
  %v216 = vld [vmem:[%s3 + $0x68] sm:$0xff]
  %v217 = vld [vmem:[%s3 + $0x70] sm:$0xff]
  %v218 = vld [vmem:[%s3 + $0x78] sm:$0xff]
  %v219 = vlaneseq
  %v220 = vshrl.u32 %v219, 7
  %v221 = vsub.s32 0, %v220
  %v222 = vrot.slane %v22, %v221
  %223 = vmatprep.subr.mxu0 0.0
  %224 = vmatpush1.msra.mxu0 %v203
  %225 = vmatprep.subr.mxu0 0.0
  %226 = vmatpush1.msra.mxu0 %v204
  %227 = vmatprep.subr.mxu0 0.0
  %228 = vmatpush1.msra.mxu0 %v205
  %229 = vmatprep.subr.mxu0 0.0
  %230 = vmatpush1.msra.mxu0 %v206
  %231 = vmatprep.subr.mxu0 0.0
  %232 = vmatpush1.msra.mxu0 %v207
  %233 = vmatprep.subr.mxu0 0.0
  %234 = vmatpush1.msra.mxu0 %v208
  %235 = vmatprep.subr.mxu0 0.0
  %236 = vmatpush1.msra.mxu0 %v209
  %237 = vmatprep.subr.mxu0 0.0
  %238 = vmatpush1.msra.mxu0 %v210
  %239 = vmatprep.subr.mxu0 0.0
  %240 = vmatpush1.msra.mxu0 %v211
  %241 = vmatprep.subr.mxu0 0.0
  %242 = vmatpush1.msra.mxu0 %v212
  %243 = vmatprep.subr.mxu0 0.0
  %244 = vmatpush1.msra.mxu0 %v213
  %245 = vmatprep.subr.mxu0 0.0
  %246 = vmatpush1.msra.mxu0 %v214
  %247 = vmatprep.subr.mxu0 0.0
  %248 = vmatpush1.msra.mxu0 %v215
  %249 = vmatprep.subr.mxu0 0.0
  %250 = vmatpush1.msra.mxu0 %v216
  %251 = vmatprep.subr.mxu0 0.0
  %252 = vmatpush1.msra.mxu0 %v217
  %253 = vmatprep.subr.mxu0 0.0
  %254 = vmatpush1.msra.mxu0 %v218
  %255 = vmatprep.subr.mxu0 0.0
  %256 = vmatpush1.msra.mxu0 0.0
  %257 = vmatprep.subr.mxu0 0.0
  %258 = vmatpush1.msra.mxu0 0.0
  %259 = vmatprep.subr.mxu0 0.0
  %260 = vmatpush1.msra.mxu0 0.0
  %261 = vmatprep.subr.mxu0 0.0
  %262 = vmatpush1.msra.mxu0 0.0
  %263 = vmatprep.subr.mxu0 0.0
  %264 = vmatpush1.msra.mxu0 0.0
  %265 = vmatprep.subr.mxu0 0.0
  %266 = vmatpush1.msra.mxu0 0.0
  %267 = vmatprep.subr.mxu0 0.0
  %268 = vmatpush1.msra.mxu0 0.0
  %269 = vmatprep.subr.mxu0 0.0
  %270 = vmatpush1.msra.mxu0 0.0
  %271 = vmatprep.subr.mxu0 0.0
  %272 = vmatpush1.msra.mxu0 0.0
  %273 = vmatprep.subr.mxu0 0.0
  %274 = vmatpush1.msra.mxu0 0.0
  %275 = vmatprep.subr.mxu0 0.0
  %276 = vmatpush1.msra.mxu0 0.0
  %277 = vmatprep.subr.mxu0 0.0
  %278 = vmatpush1.msra.mxu0 0.0
  %279 = vmatprep.subr.mxu0 0.0
  %280 = vmatpush1.msra.mxu0 0.0
  %281 = vmatprep.subr.mxu0 0.0
  %282 = vmatpush1.msra.mxu0 0.0
  %283 = vmatprep.subr.mxu0 0.0
  %284 = vmatpush1.msra.mxu0 0.0
  %285 = vmatprep.subr.mxu0 0.0
  %286 = vmatpush1.msra.mxu0 0.0
  %287 = vmatprep.mubr.f32.mxu0 0.0
  %288 = vmatmul.mubr.f32.gmra.mrb[0].mxu0 %v202
  %v289 = vpop.f32.mrb[0].mxu0
  %v290 = vadd.f32 %v222, %v289
  %v291 = vpop.f32.mrb[0].mxu0
  %292 = vdwg.mxu0
  %vm293 = vcmask 130048
  %294 = vst.msk [vmem:[%s5] sm:$0xff] %vm293, %v290
  // Predicated region
  $region22: #{actor_critic_forward.1} parent=0 // pred_check
    _
  $region23: #{actor_critic_forward.1} parent=0 // pred_check_branch
    %296 = sbr.rel (0) target = $region25
  $region24: #{actor_critic_forward.1} parent=0 // pred_region
    _
  $region25: #{actor_critic_forward.1} parent=0 // pred_fallthru
    _
  // Predicated region
  $region26: #{actor_critic_forward.1} parent=0 // pred_check
    _
  $region27: #{actor_critic_forward.1} parent=0 // pred_check_branch
    %298 = sbr.rel (0) target = $region29
  $region28: #{actor_critic_forward.1} parent=0 // pred_region
    _
  $region29: #{actor_critic_forward.1} parent=0 // pred_fallthru
    _

</llo_original>
